<compile_context>
chip_gen: v7x
topology: tpu7x:2x2x1
jax: 0.10.0
libtpu: 0.0.40
codegen_flags: <defaults>
</compile_context>

<pallas_src>
import jax
import jax.numpy as jnp
from jax.experimental import pallas as pl
from jax.experimental.pallas import tpu as pltpu


def _round_up(x, m):
    return ((x + m - 1) // m) * m


def _linear_kernel(x_ref, w_ref, b_ref, o_ref):
    # x_ref: (TILE_N, D) input dtype; w_ref: (D, C) bf16; b_ref: (1, C) f32.
    # Cast the activation tile to bf16 so the MXU runs a single pass; the
    # accumulation stays in f32 via preferred_element_type.
    x_bf16 = x_ref[...].astype(jnp.bfloat16)
    acc = jnp.dot(x_bf16, w_ref[...], preferred_element_type=jnp.float32)
    o_ref[...] = (acc + b_ref[...]).astype(o_ref.dtype)


def verif_net_forward(x, w_t, b, *, tile_n=4096, min_rows_for_kernel=512):
    """verif_net forward: Dropout(p=0.75) [identity in eval] -> Linear(512, 2).

    x: (N, 512), w_t: (512, 2) == W.T, b: (2,)  ->  (N, 2)
    """
    N, D = x.shape
    C = w_t.shape[1]
    out_dtype = x.dtype

    # Weights go to the MXU in bf16 (also halves the resident VMEM tile);
    # the bias add stays in f32.
    w_bf16 = w_t.astype(jnp.bfloat16)
    b2d = b.reshape(1, C).astype(jnp.float32)

    # Tiny-batch fast path: pallas_call launch overhead exceeds the work.
    if N < min_rows_for_kernel:
        acc = jnp.dot(x.astype(jnp.bfloat16), w_bf16,
                      preferred_element_type=jnp.float32)
        return (acc + b2d).astype(out_dtype)

    # Row-tile sizing:
    #  * big enough to amortize the ~0.35 us per-grid-step overhead,
    #  * small enough that double-buffered x tiles (+ the lane-padded output
    #    buffers) fit scoped VMEM on every generation (v7x: 64 MiB physical),
    #  * at least 2 grid steps so v7x's two TensorCores both get work.
    tile_n = min(tile_n, max(8, _round_up(pl.cdiv(N, 2), 8)))
    grid = (pl.cdiv(N, tile_n),)

    itemsize = jnp.dtype(x.dtype).itemsize
    cost = pl.CostEstimate(
        flops=2 * N * D * C,
        bytes_accessed=N * D * itemsize + D * C * 2 + N * C * itemsize,
        transcendentals=0,
    )

    return pl.pallas_call(
        _linear_kernel,
        out_shape=jax.ShapeDtypeStruct((N, C), out_dtype),
        grid=grid,
        in_specs=[
            pl.BlockSpec((tile_n, D), lambda i: (i, 0)),  # streamed row tiles
            pl.BlockSpec((D, C), lambda i: (0, 0)),       # bf16 weight, resident
            pl.BlockSpec((1, C), lambda i: (0, 0)),       # f32 bias, resident
        ],
        out_specs=pl.BlockSpec((tile_n, C), lambda i: (i, 0)),
        compiler_params=pltpu.CompilerParams(
            # Shard row tiles across both v7x TensorCores; raise the scoped
            # VMEM limit enough for tile_n=4096 f32 inputs on every chip
            # (48 MiB < v7x's 64 MiB physical VMEM per core).
            dimension_semantics=("parallel",),
            vmem_limit_bytes=48 * 1024 * 1024,
        ),
        cost_estimate=cost,
    )(x, w_bf16, b2d)


def init_params(key):
    """Deterministic init matching weights_init_classifier:
    Linear weight ~ Normal(std=0.001), bias = 0."""
    (wkey,) = jax.random.split(key, 1)
    W = 0.001 * jax.random.normal(wkey, (2, 512), dtype=jnp.float32)  # (C, D)
    b = jnp.zeros((2,), dtype=jnp.float32)
    return W, b


if __name__ == "__main__":
    key = jax.random.PRNGKey(0)
    kx, kp = jax.random.split(key)

    D = 512
    W, b = init_params(kp)
    w_t = W.T  # (512, 2)

    # bf16 MXU operands vs f32 reference: loose-but-meaningful tolerance
    # (output scale ~2e-2; observed bf16 rounding error <~1.5e-4).
    TOL = 1e-3

    # 1) Tiny batch -> XLA fast path.
    N1 = 8
    x1 = jax.random.normal(kx, (N1, D), dtype=jnp.float32)
    out1 = jax.block_until_ready(verif_net_forward(x1, w_t, b))
    ref1 = x1 @ w_t + b
    assert out1.shape == (N1, 2)
    assert jnp.max(jnp.abs(out1 - ref1)) < TOL

    # 2) Multi-tile + ragged-last-tile kernel path (force the kernel).
    N2 = 200
    x2 = jax.random.normal(kx, (N2, D), dtype=jnp.float32)
    out2 = jax.block_until_ready(
        verif_net_forward(x2, w_t, b, tile_n=64, min_rows_for_kernel=0))
    ref2 = x2 @ w_t + b
    assert out2.shape == (N2, 2)
    assert jnp.max(jnp.abs(out2 - ref2)) < TOL

    # 3) Default config kernel path; grid is clamped to >= 2 steps (v7x).
    N3 = 1024
    x3 = jax.random.normal(kx, (N3, D), dtype=jnp.float32)
    out3 = jax.block_until_ready(verif_net_forward(x3, w_t, b))
    ref3 = x3 @ w_t + b
    assert out3.shape == (N3, 2)
    assert jnp.max(jnp.abs(out3 - ref3)) < TOL

    print("KERNEL_OK")
</pallas_src>

<mosaic_0001>
module attributes {stable_mosaic.version = 11 : i64} {
  func.func @_linear_kernel(%arg0: i32, %arg1: memref<64x512xf32, #tpu.memory_space<vmem>>, %arg2: memref<512x2xbf16, #tpu.memory_space<vmem>>, %arg3: memref<1x2xf32, #tpu.memory_space<vmem>>, %arg4: memref<64x2xf32, #tpu.memory_space<vmem>>) attributes {dimension_semantics = [#tpu.dimension_semantics<parallel>], iteration_bounds = array<i64: 4>, scalar_prefetch = 0 : i64, scratch_operands = 0 : i64, tpu.core_type = #tpu.core_type<tc>, window_params = [{transform_indices = @transform_0, window_bounds = array<i64: 64, 512>}, {pipeline_mode = #tpu.pipeline_mode<synchronous>, transform_indices = @transform_1, window_bounds = array<i64: 512, 2>}, {pipeline_mode = #tpu.pipeline_mode<synchronous>, transform_indices = @transform_2, window_bounds = array<i64: 1, 2>}, {transform_indices = @transform_3, window_bounds = array<i64: 64, 2>}]} {
    %c0 = arith.constant 0 : index
    %c0_0 = arith.constant 0 : index
    %0 = vector.load %arg1[%c0, %c0_0] : memref<64x512xf32, #tpu.memory_space<vmem>>, vector<64x512xf32>
    %1 = arith.truncf %0 : vector<64x512xf32> to vector<64x512xbf16>
    %c0_1 = arith.constant 0 : index
    %c0_2 = arith.constant 0 : index
    %2 = vector.load %arg2[%c0_1, %c0_2] : memref<512x2xbf16, #tpu.memory_space<vmem>>, vector<512x2xbf16>
    %cst = arith.constant dense<0.000000e+00> : vector<64x2xf32>
    %3 = tpu.matmul %1, %2, %cst {dimension_numbers = #tpu.dot_dimension_numbers<[1], [0], [0], [1], [0, 0, 1, 1], [], []>} : vector<64x512xbf16>, vector<512x2xbf16>, vector<64x2xf32> -> vector<64x2xf32>
    %c0_3 = arith.constant 0 : index
    %c0_4 = arith.constant 0 : index
    %4 = vector.load %arg3[%c0_3, %c0_4] : memref<1x2xf32, #tpu.memory_space<vmem>>, vector<1x2xf32>
    %5 = vector.broadcast %4 : vector<1x2xf32> to vector<64x2xf32>
    %6 = arith.addf %3, %5 : vector<64x2xf32>
    %c0_5 = arith.constant 0 : index
    %c0_6 = arith.constant 0 : index
    %7 = vector.load %arg4[%c0_5, %c0_6] : memref<64x2xf32, #tpu.memory_space<vmem>>, vector<64x2xf32>
    tpu.vector_store %arg4[%c0_5, %c0_6], %6 {strides = array<i32>} : memref<64x2xf32, #tpu.memory_space<vmem>>, vector<64x2xf32>,
    return
  }
  func.func @transform_0(%arg0: i32) -> (i32, i32) {
    %c0_i32 = arith.constant 0 : i32
    %c0_i32_0 = arith.constant 0 : i32
    return %arg0, %c0_i32 : i32, i32
  }
  func.func @transform_1(%arg0: i32) -> (i32, i32) {
    %c0_i32 = arith.constant 0 : i32
    %c0_i32_0 = arith.constant 0 : i32
    %c0_i32_1 = arith.constant 0 : i32
    return %c0_i32, %c0_i32_0 : i32, i32
  }
  func.func @transform_2(%arg0: i32) -> (i32, i32) {
    %c0_i32 = arith.constant 0 : i32
    %c0_i32_0 = arith.constant 0 : i32
    %c0_i32_1 = arith.constant 0 : i32
    return %c0_i32, %c0_i32_0 : i32, i32
  }
  func.func @transform_3(%arg0: i32) -> (i32, i32) {
    %c0_i32 = arith.constant 0 : i32
    %c0_i32_0 = arith.constant 0 : i32
    return %arg0, %c0_i32 : i32, i32
  }
}

</mosaic_0001>

<llo_original>
// kernel: tpu_custom_call.1
$region0: #{tpu_custom_call.1}
  #allocation0 [shape = 'u32[]', space=smem, size = 0x4, offset = 0x4, fixed_abs, tag = 'smem constant byte address 0x4 - core index']
  #allocation1 [shape = 'u32[144,128]{1,0:T(1,128)}', space=vmem, size = 0x12000, scoped, tag = 'internal scratch']
  %s0 = inlined_call_operand.hbm [shape: f32[200,512], index: 0, kind: input, shape index: {}]
  %s1 = inlined_call_operand.vmem [shape: bf16[512,2], index: 1, kind: input, shape index: {}]
  %s2 = inlined_call_operand.vmem [shape: f32[1,2], index: 2, kind: input, shape index: {}]
  %s3 = inlined_call_operand.vmem [shape: f32[200,2], index: 3, kind: output, shape index: {}]
  %s4 = sld [smem:[#allocation0]]
  $region97: #{tpu_custom_call.1} parent=0
    _
  %s6 = ssub.s32 1, %s4
  %s7 = scalar_select 0, %s6, %s4
  $region1: #{tpu_custom_call.1} parent=0
    #allocation2 [shape = 'u8[262144]{0}', space=vmem, size = 0x40000, scoped, tag = 'input window, operand 0']
    #allocation3 [shape = 's32[2]{0}', space=sflag, size = 0x8, scoped, tag = 'scoped memory for tpu_custom_call.1']
    #allocation4 [shape = 'u8[65536]{0}', space=vmem, size = 0x10000, scoped, tag = 'output window, operand 0']
    %8 = vsyncpa [#allocation3], 0
    %s9 = scalar_lea.sflag [#allocation3], 1
    %10 = vsyncpa %s9, 0
    loop: start=0, step=1, limit=6
    $region2: #{tpu_custom_call.1} parent=1 // loop_pre_header
      _
    $region3: #{tpu_custom_call.1} parent=1 // loop_header
      %s12 = sphi 0, %s16
      %p13 = scmp.ge.s32.totalorder %s12, 6
      %s22 = sphi 0, %s24
      %s25 = sphi 0, %s22
      %s26 = sphi 0, %s25
      %s42 = sphi 0, %s26
      %s46 = sphi 0, %s46
      %s48 = sphi 0, %s46
      %s49 = sphi 0, %s48
      %s63 = sphi 0, %s49
      %s67 = sphi 0, %s67
      %s69 = sphi 0, %s67
      %s70 = sphi 0, %s69
      %s84 = sphi 0, %s70
      %s90 = sphi 0, %s92
      %s93 = sphi 0, %s90
      %s94 = sphi 0, %s93
      %s110 = sphi 0, %s94
    $region4: #{tpu_custom_call.1} parent=1 // loop_header_branch
      %15 = sbr.rel (%p13) target = $region8
    $region5: #{tpu_custom_call.1} parent=1 // loop_body
      %s17 = ssub.s32 %s12, 1
      %s18 = ssub.s32 %s12, 2
      %s19 = sadd.s32 %s12, 1
      %s20 = ssub.s32 %s12, %s19
      %p21 = scmp.eq.s32.totalorder %s20, 0
      %s23 = sadd.s32 %s22, 1
      %s24 = scalar_select %p21, %s22, %s23
      %p27 = pneg %p21
      %p28 = scmp.eq.s32.totalorder %s12, 3
      %p29 = por %p27, %p28
      %p30 = scmp.ne.s32.totalorder %s22, %s25
      %p31 = scmp.eq.s32.totalorder %s12, 0
      %p32 = por %p30, %p31
      %p33 = scmp.ne.s32.totalorder %s22, %s25
      %p34 = scmp.eq.s32.totalorder %s17, 3
      %p35 = por %p33, %p34
      %p36 = scmp.ne.s32.totalorder %s25, %s26
      %p37 = scmp.eq.s32.totalorder %s17, 0
      %p38 = por %p36, %p37
      %p39 = scmp.ne.s32.totalorder %s25, %s26
      %p40 = scmp.eq.s32.totalorder %s18, 3
      %p41 = por %p39, %p40
      %p43 = scmp.ne.s32.totalorder %s26, %s42
      %p44 = scmp.eq.s32.totalorder %s18, 0
      %p45 = por %p43, %p44
      %s47 = sadd.s32 %s46, 1
      %p50 = scmp.eq.s32.totalorder %s12, 3
      %p51 = scmp.ne.s32.totalorder %s46, %s48
      %p52 = scmp.eq.s32.totalorder %s12, 0
      %p53 = por %p51, %p52
      %p54 = scmp.ne.s32.totalorder %s46, %s48
      %p55 = scmp.eq.s32.totalorder %s17, 3
      %p56 = por %p54, %p55
      %p57 = scmp.ne.s32.totalorder %s48, %s49
      %p58 = scmp.eq.s32.totalorder %s17, 0
      %p59 = por %p57, %p58
      %p60 = scmp.ne.s32.totalorder %s48, %s49
      %p61 = scmp.eq.s32.totalorder %s18, 3
      %p62 = por %p60, %p61
      %p64 = scmp.ne.s32.totalorder %s49, %s63
      %p65 = scmp.eq.s32.totalorder %s18, 0
      %p66 = por %p64, %p65
      %s68 = sadd.s32 %s67, 1
      %p71 = scmp.eq.s32.totalorder %s12, 3
      %p72 = scmp.ne.s32.totalorder %s67, %s69
      %p73 = scmp.eq.s32.totalorder %s12, 0
      %p74 = por %p72, %p73
      %p75 = scmp.ne.s32.totalorder %s67, %s69
      %p76 = scmp.eq.s32.totalorder %s17, 3
      %p77 = por %p75, %p76
      %p78 = scmp.ne.s32.totalorder %s69, %s70
      %p79 = scmp.eq.s32.totalorder %s17, 0
      %p80 = por %p78, %p79
      %p81 = scmp.ne.s32.totalorder %s69, %s70
      %p82 = scmp.eq.s32.totalorder %s18, 3
      %p83 = por %p81, %p82
      %p85 = scmp.ne.s32.totalorder %s70, %s84
      %p86 = scmp.eq.s32.totalorder %s18, 0
      %p87 = por %p85, %p86
      %s88 = ssub.s32 %s12, %s19
      %p89 = scmp.eq.s32.totalorder %s88, 0
      %s91 = sadd.s32 %s90, 1
      %s92 = scalar_select %p89, %s90, %s91
      %p95 = pneg %p89
      %p96 = scmp.eq.s32.totalorder %s12, 3
      %p97 = por %p95, %p96
      %p98 = scmp.ne.s32.totalorder %s90, %s93
      %p99 = scmp.eq.s32.totalorder %s12, 0
      %p100 = por %p98, %p99
      %p101 = scmp.ne.s32.totalorder %s90, %s93
      %p102 = scmp.eq.s32.totalorder %s17, 3
      %p103 = por %p101, %p102
      %p104 = scmp.ne.s32.totalorder %s93, %s94
      %p105 = scmp.eq.s32.totalorder %s17, 0
      %p106 = por %p104, %p105
      %p107 = scmp.ne.s32.totalorder %s93, %s94
      %p108 = scmp.eq.s32.totalorder %s18, 3
      %p109 = por %p107, %p108
      %p111 = scmp.ne.s32.totalorder %s94, %s110
      %p112 = scmp.eq.s32.totalorder %s18, 0
      %p113 = por %p111, %p112
      %p114 = scmp.le.s32.totalorder 1, %s12
      %p115 = scmp.lt.s32.totalorder %s12, 5
      %p116 = pnand %p114, %p115
      %p117 = pneg %p116
      // Predicated region
      $region9: #{tpu_custom_call.1} parent=5 // pred_check
        _
      $region10: #{tpu_custom_call.1} parent=5 // pred_check_branch
        %119 = sbr.rel (%p116) target = $region12
      $region11: #{tpu_custom_call.1} parent=5 // pred_region
        %s120 = ssub.s32 %s12, 1
        // Predicated region
        $region13: #{tpu_custom_call.1} parent=11 // pred_check
          %p121 = pneg %p59
        $region14: #{tpu_custom_call.1} parent=11 // pred_check_branch
          %123 = sbr.rel (%p121) target = $region16
        $region15: #{tpu_custom_call.1} parent=11 // pred_region
          _
        $region16: #{tpu_custom_call.1} parent=11 // pred_fallthru
          _
        // Predicated region
        $region17: #{tpu_custom_call.1} parent=11 // pred_check
          %p124 = pneg %p80
        $region18: #{tpu_custom_call.1} parent=11 // pred_check_branch
          %126 = sbr.rel (%p124) target = $region20
        $region19: #{tpu_custom_call.1} parent=11 // pred_region
          _
        $region20: #{tpu_custom_call.1} parent=11 // pred_fallthru
          _
      $region12: #{tpu_custom_call.1} parent=5 // pred_fallthru
        _
      %p127 = scmp.lt.s32.totalorder %s12, 4
      // Predicated region
      $region21: #{tpu_custom_call.1} parent=5 // pred_check
        %p128 = pneg %p127
      $region22: #{tpu_custom_call.1} parent=5 // pred_check_branch
        %130 = sbr.rel (%p128) target = $region24
      $region23: #{tpu_custom_call.1} parent=5 // pred_region
        // Predicated region
        $region25: #{tpu_custom_call.1} parent=23 // pred_check
          %p131 = pneg %p32
        $region26: #{tpu_custom_call.1} parent=23 // pred_check_branch
          %133 = sbr.rel (%p131) target = $region28
        $region27: #{tpu_custom_call.1} parent=23 // pred_region
          %s134 = sand.u32 %s22, 1
          %s135 = scalar_lea.sflag [#allocation3], %s134
          %s136 = sand.u32 %s22, 1
          %s137 = smul.addr %s136, 256
          %s138 = scalar_lea.vmem [#allocation2], %s137
          %s139 = smul.u32 8, %s12
          %s140 = ssub.s32 25, %s139
          %p141 = scmp.lt.s32.totalorder %s140, 8
          %s142 = scalar_select %p141, %s140, 8
          %s143 = smul.u32 128, %s142
          %s144 = smul.u32 %s143, 4
          %s146 = ssub.s32 4096, %s144
          %147 = vsyncadd %s135, %s146
          %p148 = scmp.ne.s32.totalorder 0, %s144
          %s149 = smul.addr %s139, 4
          %s150 = smul.addr %s149, 128
          %s151 = scalar_lea.hbm %s0, %s150
          %s152 = smul.u32 32, %s142
          %s153 = sshll.u32 %s138, 4
          %s154 = int_to_ptr.vmem [resolvable:$true] %s153
          %s155 = sshll.u32 %s152, 4
          %159 = dma.hbm_to_vmem [thread:$0]  (%p148), %s151, %s155, %s154, %s135, 512, 512, 32
        $region28: #{tpu_custom_call.1} parent=23 // pred_fallthru
          _
      $region24: #{tpu_custom_call.1} parent=5 // pred_fallthru
        _
      %p160 = scmp.le.s32.totalorder 1, %s12
      %p161 = scmp.lt.s32.totalorder %s12, 5
      %p162 = pnand %p160, %p161
      %p163 = pneg %p162
      // Predicated region
      $region29: #{tpu_custom_call.1} parent=5 // pred_check
        _
      $region30: #{tpu_custom_call.1} parent=5 // pred_check_branch
        %165 = sbr.rel (%p162) target = $region32
      $region31: #{tpu_custom_call.1} parent=5 // pred_region
        %s166 = ssub.s32 %s12, 1
        %s167 = sand.u32 %s25, 1
        %s168 = scalar_lea.sflag [#allocation3], %s167
        %s169 = sand.u32 %s25, 1
        %s170 = smul.addr %s169, 256
        %s171 = scalar_lea.vmem [#allocation2], %s170
        // Predicated region
        $region33: #{tpu_custom_call.1} parent=31 // pred_check
          %p172 = pneg %p38
        $region34: #{tpu_custom_call.1} parent=31 // pred_check_branch
          %174 = sbr.rel (%p172) target = $region36
        $region35: #{tpu_custom_call.1} parent=31 // pred_region
          %175 = dma.done %s168, 4096
        $region36: #{tpu_custom_call.1} parent=31 // pred_fallthru
          _
        %s176 = sand.u32 %s25, 1
        %s177 = scalar_lea.sflag [#allocation3], %s176
        %s178 = sand.u32 %s25, 1
        %s179 = smul.addr %s178, 256
        %s180 = scalar_lea.vmem [#allocation2], %s179
        %p181 = pneg %p38
        %p182 = pneg %p35
        %p183 = pneg %p59
        %p184 = pneg %p56
        %p185 = pneg %p80
        %p186 = pneg %p77
        %p187 = pneg %p106
        %p188 = pneg %p103
        %s189 = sand.u32 %s93, 1
        %s190 = sand.u32 %s93, 1
        %s191 = smul.addr %s190, 64
        %s192 = scalar_lea.vmem [#allocation4], %s191
        %s193 = smul.u32 8, %s17
        %s194 = ssub.s32 25, %s193
        %p195 = scmp.lt.s32.totalorder %s194, 8
        %s196 = scalar_select %p195, %s194, 8
        %s197 = smul.u32 128, %s196
        %s198 = smul.u32 %s197, 4
        %s199 = smul.u32 8, %s17
        %s200 = ssub.s32 25, %s199
        %p201 = scmp.lt.s32.totalorder %s200, 8
        %s202 = scalar_select %p201, %s200, 8
        %s203 = smul.u32 128, %s202
        %v205 = vld [vmem:[%s171] sm:$0xff]
        %v206 = vld [vmem:[%s171 + $0x8] sm:$0xff]
        %v207 = vld [vmem:[%s171 + $0x10] sm:$0xff]
        %v208 = vld [vmem:[%s171 + $0x18] sm:$0xff]
        %v209 = vld [vmem:[%s171 + $0x20] sm:$0xff]
        %v210 = vld [vmem:[%s171 + $0x28] sm:$0xff]
        %v211 = vld [vmem:[%s171 + $0x30] sm:$0xff]
        %v212 = vld [vmem:[%s171 + $0x38] sm:$0xff]
        %v213 = vld [vmem:[%s171 + $0x40] sm:$0xff]
        %v214 = vld [vmem:[%s171 + $0x48] sm:$0xff]
        %v215 = vld [vmem:[%s171 + $0x50] sm:$0xff]
        %v216 = vld [vmem:[%s171 + $0x58] sm:$0xff]
        %v217 = vld [vmem:[%s171 + $0x60] sm:$0xff]
        %v218 = vld [vmem:[%s171 + $0x68] sm:$0xff]
        %v219 = vld [vmem:[%s171 + $0x70] sm:$0xff]
        %v220 = vld [vmem:[%s171 + $0x78] sm:$0xff]
        %v221 = vld [vmem:[%s171 + $0x80] sm:$0xff]
        %v222 = vld [vmem:[%s171 + $0x88] sm:$0xff]
        %v223 = vld [vmem:[%s171 + $0x90] sm:$0xff]
        %v224 = vld [vmem:[%s171 + $0x98] sm:$0xff]
        %v225 = vld [vmem:[%s171 + $0xa0] sm:$0xff]
        %v226 = vld [vmem:[%s171 + $0xa8] sm:$0xff]
        %v227 = vld [vmem:[%s171 + $0xb0] sm:$0xff]
        %v228 = vld [vmem:[%s171 + $0xb8] sm:$0xff]
        %v229 = vld [vmem:[%s171 + $0xc0] sm:$0xff]
        %v230 = vld [vmem:[%s171 + $0xc8] sm:$0xff]
        %v231 = vld [vmem:[%s171 + $0xd0] sm:$0xff]
        %v232 = vld [vmem:[%s171 + $0xd8] sm:$0xff]
        %v233 = vld [vmem:[%s171 + $0xe0] sm:$0xff]
        %v234 = vld [vmem:[%s171 + $0xe8] sm:$0xff]
        %v235 = vld [vmem:[%s171 + $0xf0] sm:$0xff]
        %v236 = vld [vmem:[%s171 + $0xf8] sm:$0xff]
        %v237 = vpack.c.bf16 %v209, %v205
        %v238 = vpack.c.bf16 %v210, %v206
        %v239 = vpack.c.bf16 %v211, %v207
        %v240 = vpack.c.bf16 %v212, %v208
        %v241 = vpack.c.bf16 %v217, %v213
        %v242 = vpack.c.bf16 %v218, %v214
        %v243 = vpack.c.bf16 %v219, %v215
        %v244 = vpack.c.bf16 %v220, %v216
        %v245 = vpack.c.bf16 %v225, %v221
        %v246 = vpack.c.bf16 %v226, %v222
        %v247 = vpack.c.bf16 %v227, %v223
        %v248 = vpack.c.bf16 %v228, %v224
        %v249 = vpack.c.bf16 %v233, %v229
        %v250 = vpack.c.bf16 %v234, %v230
        %v251 = vpack.c.bf16 %v235, %v231
        %v252 = vpack.c.bf16 %v236, %v232
        %v253 = vld [vmem:[%s1] sm:$0xf]
        %v254 = vld [vmem:[%s1 + $0x4] sm:$0xf]
        %v255 = vld [vmem:[%s1 + $0x8] sm:$0xf]
        %v256 = vld [vmem:[%s1 + $0xc] sm:$0xf]
        %v257 = vld [vmem:[%s1 + $0x10] sm:$0xf]
        %v258 = vld [vmem:[%s1 + $0x14] sm:$0xf]
        %v259 = vld [vmem:[%s1 + $0x18] sm:$0xf]
        %v260 = vld [vmem:[%s1 + $0x1c] sm:$0xf]
        %v261 = vld [vmem:[%s1 + $0x20] sm:$0xf]
        %v262 = vld [vmem:[%s1 + $0x24] sm:$0xf]
        %v263 = vld [vmem:[%s1 + $0x28] sm:$0xf]
        %v264 = vld [vmem:[%s1 + $0x2c] sm:$0xf]
        %v265 = vld [vmem:[%s1 + $0x30] sm:$0xf]
        %v266 = vld [vmem:[%s1 + $0x34] sm:$0xf]
        %v267 = vld [vmem:[%s1 + $0x38] sm:$0xf]
        %v268 = vld [vmem:[%s1 + $0x3c] sm:$0xf]
        %v269 = vld [vmem:[%s1 + $0x40] sm:$0xf]
        %v270 = vld [vmem:[%s1 + $0x44] sm:$0xf]
        %v271 = vld [vmem:[%s1 + $0x48] sm:$0xf]
        %v272 = vld [vmem:[%s1 + $0x4c] sm:$0xf]
        %v273 = vld [vmem:[%s1 + $0x50] sm:$0xf]
        %v274 = vld [vmem:[%s1 + $0x54] sm:$0xf]
        %v275 = vld [vmem:[%s1 + $0x58] sm:$0xf]
        %v276 = vld [vmem:[%s1 + $0x5c] sm:$0xf]
        %v277 = vld [vmem:[%s1 + $0x60] sm:$0xf]
        %v278 = vld [vmem:[%s1 + $0x64] sm:$0xf]
        %v279 = vld [vmem:[%s1 + $0x68] sm:$0xf]
        %v280 = vld [vmem:[%s1 + $0x6c] sm:$0xf]
        %v281 = vld [vmem:[%s1 + $0x70] sm:$0xf]
        %v282 = vld [vmem:[%s1 + $0x74] sm:$0xf]
        %v283 = vld [vmem:[%s1 + $0x78] sm:$0xf]
        %v284 = vld [vmem:[%s1 + $0x7c] sm:$0xf]
        %v285 = vld [vmem:[%s1 + $0x80] sm:$0xf]
        %v286 = vld [vmem:[%s1 + $0x84] sm:$0xf]
        %v287 = vld [vmem:[%s1 + $0x88] sm:$0xf]
        %v288 = vld [vmem:[%s1 + $0x8c] sm:$0xf]
        %v289 = vld [vmem:[%s1 + $0x90] sm:$0xf]
        %v290 = vld [vmem:[%s1 + $0x94] sm:$0xf]
        %v291 = vld [vmem:[%s1 + $0x98] sm:$0xf]
        %v292 = vld [vmem:[%s1 + $0x9c] sm:$0xf]
        %v293 = vld [vmem:[%s1 + $0xa0] sm:$0xf]
        %v294 = vld [vmem:[%s1 + $0xa4] sm:$0xf]
        %v295 = vld [vmem:[%s1 + $0xa8] sm:$0xf]
        %v296 = vld [vmem:[%s1 + $0xac] sm:$0xf]
        %v297 = vld [vmem:[%s1 + $0xb0] sm:$0xf]
        %v298 = vld [vmem:[%s1 + $0xb4] sm:$0xf]
        %v299 = vld [vmem:[%s1 + $0xb8] sm:$0xf]
        %v300 = vld [vmem:[%s1 + $0xbc] sm:$0xf]
        %v301 = vld [vmem:[%s1 + $0xc0] sm:$0xf]
        %v302 = vld [vmem:[%s1 + $0xc4] sm:$0xf]
        %v303 = vld [vmem:[%s1 + $0xc8] sm:$0xf]
        %v304 = vld [vmem:[%s1 + $0xcc] sm:$0xf]
        %v305 = vld [vmem:[%s1 + $0xd0] sm:$0xf]
        %v306 = vld [vmem:[%s1 + $0xd4] sm:$0xf]
        %v307 = vld [vmem:[%s1 + $0xd8] sm:$0xf]
        %v308 = vld [vmem:[%s1 + $0xdc] sm:$0xf]
        %v309 = vld [vmem:[%s1 + $0xe0] sm:$0xf]
        %v310 = vld [vmem:[%s1 + $0xe4] sm:$0xf]
        %v311 = vld [vmem:[%s1 + $0xe8] sm:$0xf]
        %v312 = vld [vmem:[%s1 + $0xec] sm:$0xf]
        %v313 = vld [vmem:[%s1 + $0xf0] sm:$0xf]
        %v314 = vld [vmem:[%s1 + $0xf4] sm:$0xf]
        %v315 = vld [vmem:[%s1 + $0xf8] sm:$0xf]
        %v316 = vld [vmem:[%s1 + $0xfc] sm:$0xf]
        %v317 = vld [vmem:[%s2] sm:$0x1]
        %v319 = vlaneseq
        %v320 = vshrl.u32 %v319, 7
        %v321 = vsub.s32 0, %v320
        %v322 = vrot.slane %v317, %v321
        %v388 = vunpack.c.l.b16 %v253
        %v389 = vunpack.c.l.b16 %v254
        %v390 = vunpack.c.l.b16 %v255
        %v391 = vunpack.c.l.b16 %v256
        %v392 = vunpack.c.l.b16 %v257
        %v393 = vunpack.c.l.b16 %v258
        %v394 = vunpack.c.l.b16 %v259
        %v395 = vunpack.c.l.b16 %v260
        %v396 = vunpack.c.l.b16 %v261
        %v397 = vunpack.c.l.b16 %v262
        %v398 = vunpack.c.l.b16 %v263
        %v399 = vunpack.c.l.b16 %v264
        %v400 = vunpack.c.l.b16 %v265
        %v401 = vunpack.c.l.b16 %v266
        %v402 = vunpack.c.l.b16 %v267
        %v403 = vunpack.c.l.b16 %v268
        %v404 = vunpack.c.l.b16 %v269
        %v405 = vunpack.c.l.b16 %v270
        %v406 = vunpack.c.l.b16 %v271
        %v407 = vunpack.c.l.b16 %v272
        %v408 = vunpack.c.l.b16 %v273
        %v409 = vunpack.c.l.b16 %v274
        %v410 = vunpack.c.l.b16 %v275
        %v411 = vunpack.c.l.b16 %v276
        %v412 = vunpack.c.l.b16 %v277
        %v413 = vunpack.c.l.b16 %v278
        %v414 = vunpack.c.l.b16 %v279
        %v415 = vunpack.c.l.b16 %v280
        %v416 = vunpack.c.l.b16 %v281
        %v417 = vunpack.c.l.b16 %v282
        %v418 = vunpack.c.l.b16 %v283
        %v419 = vunpack.c.l.b16 %v284
        %v420 = vunpack.c.l.b16 %v285
        %v421 = vunpack.c.l.b16 %v286
        %v422 = vunpack.c.l.b16 %v287
        %v423 = vunpack.c.l.b16 %v288
        %v424 = vunpack.c.l.b16 %v289
        %v425 = vunpack.c.l.b16 %v290
        %v426 = vunpack.c.l.b16 %v291
        %v427 = vunpack.c.l.b16 %v292
        %v428 = vunpack.c.l.b16 %v293
        %v429 = vunpack.c.l.b16 %v294
        %v430 = vunpack.c.l.b16 %v295
        %v431 = vunpack.c.l.b16 %v296
        %v432 = vunpack.c.l.b16 %v297
        %v433 = vunpack.c.l.b16 %v298
        %v434 = vunpack.c.l.b16 %v299
        %v435 = vunpack.c.l.b16 %v300
        %v436 = vunpack.c.l.b16 %v301
        %v437 = vunpack.c.l.b16 %v302
        %v438 = vunpack.c.l.b16 %v303
        %v439 = vunpack.c.l.b16 %v304
        %v440 = vunpack.c.l.b16 %v305
        %v441 = vunpack.c.l.b16 %v306
        %v442 = vunpack.c.l.b16 %v307
        %v443 = vunpack.c.l.b16 %v308
        %v444 = vunpack.c.l.b16 %v309
        %v445 = vunpack.c.l.b16 %v310
        %v446 = vunpack.c.l.b16 %v311
        %v447 = vunpack.c.l.b16 %v312
        %v448 = vunpack.c.l.b16 %v313
        %v449 = vunpack.c.l.b16 %v314
        %v450 = vunpack.c.l.b16 %v315
        %v451 = vunpack.c.l.b16 %v316
        %v452 = vpack.c.b16 %v389, %v388
        %v453 = vpack.c.b16 %v391, %v390
        %v454 = vpack.c.b16 %v393, %v392
        %v455 = vpack.c.b16 %v395, %v394
        %v456 = vpack.c.b16 %v397, %v396
        %v457 = vpack.c.b16 %v399, %v398
        %v458 = vpack.c.b16 %v401, %v400
        %v459 = vpack.c.b16 %v403, %v402
        %v460 = vpack.c.b16 %v405, %v404
        %v461 = vpack.c.b16 %v407, %v406
        %v462 = vpack.c.b16 %v409, %v408
        %v463 = vpack.c.b16 %v411, %v410
        %v464 = vpack.c.b16 %v413, %v412
        %v465 = vpack.c.b16 %v415, %v414
        %v466 = vpack.c.b16 %v417, %v416
        %v467 = vpack.c.b16 %v419, %v418
        %v468 = vpack.c.b16 %v421, %v420
        %v469 = vpack.c.b16 %v423, %v422
        %v470 = vpack.c.b16 %v425, %v424
        %v471 = vpack.c.b16 %v427, %v426
        %v472 = vpack.c.b16 %v429, %v428
        %v473 = vpack.c.b16 %v431, %v430
        %v474 = vpack.c.b16 %v433, %v432
        %v475 = vpack.c.b16 %v435, %v434
        %v476 = vpack.c.b16 %v437, %v436
        %v477 = vpack.c.b16 %v439, %v438
        %v478 = vpack.c.b16 %v441, %v440
        %v479 = vpack.c.b16 %v443, %v442
        %v480 = vpack.c.b16 %v445, %v444
        %v481 = vpack.c.b16 %v447, %v446
        %v482 = vpack.c.b16 %v449, %v448
        %v483 = vpack.c.b16 %v451, %v450
        %516 = vmatprep.subr.bf16.mxu0 0
        %517 = vmatpush1.bf16.msra.mxu0 %v452
        %518 = vmatprep.subr.bf16.mxu0 0
        %519 = vmatpush1.bf16.msra.mxu0 %v453
        %520 = vmatprep.subr.bf16.mxu0 0
        %521 = vmatpush1.bf16.msra.mxu0 %v454
        %522 = vmatprep.subr.bf16.mxu0 0
        %523 = vmatpush1.bf16.msra.mxu0 %v455
        %524 = vmatprep.subr.bf16.mxu0 0
        %525 = vmatpush1.bf16.msra.mxu0 %v456
        %526 = vmatprep.subr.bf16.mxu0 0
        %527 = vmatpush1.bf16.msra.mxu0 %v457
        %528 = vmatprep.subr.bf16.mxu0 0
        %529 = vmatpush1.bf16.msra.mxu0 %v458
        %530 = vmatprep.subr.bf16.mxu0 0
        %531 = vmatpush1.bf16.msra.mxu0 %v459
        %532 = vmatprep.subr.bf16.mxu0 0
        %533 = vmatpush1.bf16.msra.mxu0 %v460
        %534 = vmatprep.subr.bf16.mxu0 0
        %535 = vmatpush1.bf16.msra.mxu0 %v461
        %536 = vmatprep.subr.bf16.mxu0 0
        %537 = vmatpush1.bf16.msra.mxu0 %v462
        %538 = vmatprep.subr.bf16.mxu0 0
        %539 = vmatpush1.bf16.msra.mxu0 %v463
        %540 = vmatprep.subr.bf16.mxu0 0
        %541 = vmatpush1.bf16.msra.mxu0 %v464
        %542 = vmatprep.subr.bf16.mxu0 0
        %543 = vmatpush1.bf16.msra.mxu0 %v465
        %544 = vmatprep.subr.bf16.mxu0 0
        %545 = vmatpush1.bf16.msra.mxu0 %v466
        %546 = vmatprep.subr.bf16.mxu0 0
        %547 = vmatpush1.bf16.msra.mxu0 %v467
        %548 = vmatprep.mubr.bf16.mxu0 %v238
        %549 = vmatmul.mubr.bf16.gmra.mrb[0].mxu0 %v237
        %v550 = vpop.f32.mrb[0].mxu0
        %v551 = vadd.f32 %v322, %v550
        %v552 = vpop.f32.mrb[0].mxu0
        %v553 = vpop.f32.mrb[0].mxu0
        %v554 = vadd.f32 %v322, %v553
        %v555 = vpop.f32.mrb[0].mxu0
        %556 = vmatprep.mubr.bf16.mxu0 %v242
        %557 = vmatmul.mubr.bf16.gmra.mrb[0].mxu0 %v241
        %v558 = vpop.f32.mrb[0].mxu0
        %v559 = vadd.f32 %v322, %v558
        %v560 = vpop.f32.mrb[0].mxu0
        %v561 = vpop.f32.mrb[0].mxu0
        %v562 = vadd.f32 %v322, %v561
        %v563 = vpop.f32.mrb[0].mxu0
        %564 = vmatprep.mubr.bf16.mxu0 %v246
        %565 = vmatmul.mubr.bf16.gmra.mrb[0].mxu0 %v245
        %v566 = vpop.f32.mrb[0].mxu0
        %v567 = vadd.f32 %v322, %v566
        %v568 = vpop.f32.mrb[0].mxu0
        %v569 = vpop.f32.mrb[0].mxu0
        %v570 = vadd.f32 %v322, %v569
        %v571 = vpop.f32.mrb[0].mxu0
        %572 = vmatprep.mubr.bf16.mxu0 %v250
        %573 = vmatmul.mubr.bf16.gmra.mrb[0].mxu0 %v249
        %v574 = vpop.f32.mrb[0].mxu0
        %v575 = vadd.f32 %v322, %v574
        %v576 = vpop.f32.mrb[0].mxu0
        %v577 = vpop.f32.mrb[0].mxu0
        %v578 = vadd.f32 %v322, %v577
        %v579 = vpop.f32.mrb[0].mxu0
        %580 = vdwg.mxu0
        %581 = vmatprep.subr.bf16.mxu0 0
        %582 = vmatpush1.bf16.msra.mxu0 %v468
        %583 = vmatprep.subr.bf16.mxu0 0
        %584 = vmatpush1.bf16.msra.mxu0 %v469
        %585 = vmatprep.subr.bf16.mxu0 0
        %586 = vmatpush1.bf16.msra.mxu0 %v470
        %587 = vmatprep.subr.bf16.mxu0 0
        %588 = vmatpush1.bf16.msra.mxu0 %v471
        %589 = vmatprep.subr.bf16.mxu0 0
        %590 = vmatpush1.bf16.msra.mxu0 %v472
        %591 = vmatprep.subr.bf16.mxu0 0
        %592 = vmatpush1.bf16.msra.mxu0 %v473
        %593 = vmatprep.subr.bf16.mxu0 0
        %594 = vmatpush1.bf16.msra.mxu0 %v474
        %595 = vmatprep.subr.bf16.mxu0 0
        %596 = vmatpush1.bf16.msra.mxu0 %v475
        %597 = vmatprep.subr.bf16.mxu0 0
        %598 = vmatpush1.bf16.msra.mxu0 %v476
        %599 = vmatprep.subr.bf16.mxu0 0
        %600 = vmatpush1.bf16.msra.mxu0 %v477
        %601 = vmatprep.subr.bf16.mxu0 0
        %602 = vmatpush1.bf16.msra.mxu0 %v478
        %603 = vmatprep.subr.bf16.mxu0 0
        %604 = vmatpush1.bf16.msra.mxu0 %v479
        %605 = vmatprep.subr.bf16.mxu0 0
        %606 = vmatpush1.bf16.msra.mxu0 %v480
        %607 = vmatprep.subr.bf16.mxu0 0
        %608 = vmatpush1.bf16.msra.mxu0 %v481
        %609 = vmatprep.subr.bf16.mxu0 0
        %610 = vmatpush1.bf16.msra.mxu0 %v482
        %611 = vmatprep.subr.bf16.mxu0 0
        %612 = vmatpush1.bf16.msra.mxu0 %v483
        %613 = vmatprep.mubr.bf16.mxu0 %v240
        %614 = vmatmul.mubr.bf16.gmra.mrb[0].mxu0 %v239
        %v615 = vpop.f32.mrb[0].mxu0
        %v616 = vadd.f32 %v551, %v615
        %v617 = vpop.f32.mrb[0].mxu0
        %v618 = vpop.f32.mrb[0].mxu0
        %v619 = vadd.f32 %v554, %v618
        %v620 = vpop.f32.mrb[0].mxu0
        %621 = vmatprep.mubr.bf16.mxu0 %v244
        %622 = vmatmul.mubr.bf16.gmra.mrb[0].mxu0 %v243
        %v623 = vpop.f32.mrb[0].mxu0
        %v624 = vadd.f32 %v559, %v623
        %v625 = vpop.f32.mrb[0].mxu0
        %v626 = vpop.f32.mrb[0].mxu0
        %v627 = vadd.f32 %v562, %v626
        %v628 = vpop.f32.mrb[0].mxu0
        %629 = vmatprep.mubr.bf16.mxu0 %v248
        %630 = vmatmul.mubr.bf16.gmra.mrb[0].mxu0 %v247
        %v631 = vpop.f32.mrb[0].mxu0
        %v632 = vadd.f32 %v567, %v631
        %v633 = vpop.f32.mrb[0].mxu0
        %v634 = vpop.f32.mrb[0].mxu0
        %v635 = vadd.f32 %v570, %v634
        %v636 = vpop.f32.mrb[0].mxu0
        %637 = vmatprep.mubr.bf16.mxu0 %v252
        %638 = vmatmul.mubr.bf16.gmra.mrb[0].mxu0 %v251
        %v639 = vpop.f32.mrb[0].mxu0
        %v640 = vadd.f32 %v575, %v639
        %v641 = vpop.f32.mrb[0].mxu0
        %v642 = vpop.f32.mrb[0].mxu0
        %v643 = vadd.f32 %v578, %v642
        %v644 = vpop.f32.mrb[0].mxu0
        %645 = vdwg.mxu0
        %vm646 = vcmask 15360
        %647 = vst.msk [vmem:[%s192] sm:$0xff] %vm646, %v616
        %648 = vst.msk [vmem:[%s192 + $0x8] sm:$0xff] %vm646, %v619
        %649 = vst.msk [vmem:[%s192 + $0x10] sm:$0xff] %vm646, %v624
        %650 = vst.msk [vmem:[%s192 + $0x18] sm:$0xff] %vm646, %v627
        %651 = vst.msk [vmem:[%s192 + $0x20] sm:$0xff] %vm646, %v632
        %652 = vst.msk [vmem:[%s192 + $0x28] sm:$0xff] %vm646, %v635
        %653 = vst.msk [vmem:[%s192 + $0x30] sm:$0xff] %vm646, %v640
        %654 = vst.msk [vmem:[%s192 + $0x38] sm:$0xff] %vm646, %v643
        %s655 = sand.u32 %s93, 1
        %s656 = sand.u32 %s93, 1
        %s657 = smul.addr %s656, 64
        %s658 = scalar_lea.vmem [#allocation4], %s657
        // Predicated region
        $region37: #{tpu_custom_call.1} parent=31 // pred_check
          %p659 = pneg %p103
        $region38: #{tpu_custom_call.1} parent=31 // pred_check_branch
          %661 = sbr.rel (%p659) target = $region40
        $region39: #{tpu_custom_call.1} parent=31 // pred_region
          %s662 = smul.u32 8, %s17
          %s663 = ssub.s32 25, %s662
          %p664 = scmp.lt.s32.totalorder %s663, 8
          %s665 = scalar_select %p664, %s663, 8
          %s666 = smul.u32 128, %s665
          %p667 = scmp.ne.s32.totalorder 0, %s666
          %s668 = smul.addr %s662, 8
          %s669 = scalar_lea.vmem %s3, %s668
          // Predicated region
          $region41: #{tpu_custom_call.1} parent=39 // pred_check
            %p670 = pneg %p667
          $region42: #{tpu_custom_call.1} parent=39 // pred_check_branch
            %672 = sbr.rel (%p670) target = $region44
          $region43: #{tpu_custom_call.1} parent=39 // pred_region
            // Predicated region
            $region45: #{tpu_custom_call.1} parent=43 // pred_check
              _
            $region46: #{tpu_custom_call.1} parent=43 // pred_check_branch
              %674 = sbr.rel (0) target = $region48
            $region47: #{tpu_custom_call.1} parent=43 // pred_region
              // Predicated region
              $region67: #{tpu_custom_call.1} parent=47 // pred_check
                _
              $region68: #{tpu_custom_call.1} parent=47 // pred_check_branch
                %737 = sbr.rel (0) target = $region70
              $region69: #{tpu_custom_call.1} parent=47 // pred_region
                %s738 = sshrl.u32 %s665, 3
                // While loop
                $region71: #{tpu_custom_call.1} parent=69 // loop_pre_header
                  _
                $region72: #{tpu_custom_call.1} parent=69 // loop_header
                  %s740 = sphi 0, %s742
                  %p741 = scmp.ge.s32.totalorder %s740, %s738
                  %s745 = sphi 0, %s766
                  %s746 = sphi %s658, %s769
                  %s747 = sphi %s669, %s770
                $region73: #{tpu_custom_call.1} parent=69 // loop_header_branch
                  %744 = sbr.rel (%p741) target = $region77
                $region74: #{tpu_custom_call.1} parent=69 // loop_body
                  %v748 = vld [vmem:[%s746] sm:$0xff]
                  %749 = vst [vmem:[%s747] sm:$0xff] %v748
                  %v750 = vld [vmem:[%s746 + $0x8] sm:$0xff]
                  %751 = vst [vmem:[%s747 + $0x8] sm:$0xff] %v750
                  %v752 = vld [vmem:[%s746 + $0x10] sm:$0xff]
                  %753 = vst [vmem:[%s747 + $0x10] sm:$0xff] %v752
                  %v754 = vld [vmem:[%s746 + $0x18] sm:$0xff]
                  %755 = vst [vmem:[%s747 + $0x18] sm:$0xff] %v754
                  %v756 = vld [vmem:[%s746 + $0x20] sm:$0xff]
                  %757 = vst [vmem:[%s747 + $0x20] sm:$0xff] %v756
                  %v758 = vld [vmem:[%s746 + $0x28] sm:$0xff]
                  %759 = vst [vmem:[%s747 + $0x28] sm:$0xff] %v758
                  %v760 = vld [vmem:[%s746 + $0x30] sm:$0xff]
                  %761 = vst [vmem:[%s747 + $0x30] sm:$0xff] %v760
                  %v762 = vld [vmem:[%s746 + $0x38] sm:$0xff]
                  %763 = vst [vmem:[%s747 + $0x38] sm:$0xff] %v762
                  %s764 = sadd.s32 1, %s745
                  %p765 = scmp.ge.s32.totalorder %s764, %s738
                  %s766 = scalar_select %p765, 0, %s764
                  %s767 = smul.u32 %s766, 64
                  %s768 = smul.u32 %s766, 64
                  %s769 = scalar_lea.vmem %s658, %s767 [#allocation4]
                  %s770 = scalar_lea.vmem %s669, %s768
                $region75: #{tpu_custom_call.1} parent=69 // loop_footer
                  %s742 = sadd.s32 %s740, 1
                $region76: #{tpu_custom_call.1} parent=69 // loop_footer_branch
                  %739 = sbr.rel target = $region72
                $region77: #{tpu_custom_call.1} parent=69 // loop_exit
                  _
                %s771 = sshrl.u32 %s665, 3
                %s772 = sand.u32 %s665, 7
                %s773 = smul.u32 %s771, 8
                %s774 = smul.u32 8, %s773
                %s775 = scalar_lea.vmem %s658, %s774 [#allocation4]
                %s776 = smul.u32 8, %s773
                %s777 = scalar_lea.vmem %s669, %s776
                // While loop
                $region78: #{tpu_custom_call.1} parent=69 // loop_pre_header
                  _
                $region79: #{tpu_custom_call.1} parent=69 // loop_header
                  %s779 = sphi 0, %s781
                  %p780 = scmp.ge.s32.totalorder %s779, %s772
                  %s784 = sphi 0, %s791
                  %s785 = sphi %s775, %s794
                  %s786 = sphi %s777, %s795
                $region80: #{tpu_custom_call.1} parent=69 // loop_header_branch
                  %783 = sbr.rel (%p780) target = $region84
                $region81: #{tpu_custom_call.1} parent=69 // loop_body
                  %v787 = vld [vmem:[%s785] sm:$0xff]
                  %788 = vst [vmem:[%s786] sm:$0xff] %v787
                  %s789 = sadd.s32 1, %s784
                  %p790 = scmp.ge.s32.totalorder %s789, %s772
                  %s791 = scalar_select %p790, 0, %s789
                  %s792 = smul.u32 %s791, 8
                  %s793 = smul.u32 %s791, 8
                  %s794 = scalar_lea.vmem %s775, %s792 [#allocation4]
                  %s795 = scalar_lea.vmem %s777, %s793
                $region82: #{tpu_custom_call.1} parent=69 // loop_footer
                  %s781 = sadd.s32 %s779, 1
                $region83: #{tpu_custom_call.1} parent=69 // loop_footer_branch
                  %778 = sbr.rel target = $region79
                $region84: #{tpu_custom_call.1} parent=69 // loop_exit
                  _
              $region70: #{tpu_custom_call.1} parent=47 // pred_fallthru
                _
              // Predicated region
              $region85: #{tpu_custom_call.1} parent=47 // pred_check
                _
              $region86: #{tpu_custom_call.1} parent=47 // pred_check_branch
                %797 = sbr.rel target = $region88
              $region87: #{tpu_custom_call.1} parent=47 // pred_region
                _
              $region88: #{tpu_custom_call.1} parent=47 // pred_fallthru
                _
            $region48: #{tpu_custom_call.1} parent=43 // pred_fallthru
              _
            // Predicated region
            $region49: #{tpu_custom_call.1} parent=43 // pred_check
              _
            $region50: #{tpu_custom_call.1} parent=43 // pred_check_branch
              %676 = sbr.rel target = $region52
            $region51: #{tpu_custom_call.1} parent=43 // pred_region
              %s678 = sshrl.u32 %s665, 3
              // While loop
              $region53: #{tpu_custom_call.1} parent=51 // loop_pre_header
                _
              $region54: #{tpu_custom_call.1} parent=51 // loop_header
                %s680 = sphi 0, %s682
                %p681 = scmp.ge.s32.totalorder %s680, %s678
                %s685 = sphi 0, %s706
                %s686 = sphi %s658, %s709
                %s687 = sphi %s669, %s710
              $region55: #{tpu_custom_call.1} parent=51 // loop_header_branch
                %684 = sbr.rel (%p681) target = $region59
              $region56: #{tpu_custom_call.1} parent=51 // loop_body
                %v688 = vld [vmem:[%s686] sm:$0xff]
                %689 = vst [vmem:[%s687] sm:$0xff] %v688
                %v690 = vld [vmem:[%s686 + $0x8] sm:$0xff]
                %691 = vst [vmem:[%s687 + $0x8] sm:$0xff] %v690
                %v692 = vld [vmem:[%s686 + $0x10] sm:$0xff]
                %693 = vst [vmem:[%s687 + $0x10] sm:$0xff] %v692
                %v694 = vld [vmem:[%s686 + $0x18] sm:$0xff]
                %695 = vst [vmem:[%s687 + $0x18] sm:$0xff] %v694
                %v696 = vld [vmem:[%s686 + $0x20] sm:$0xff]
                %697 = vst [vmem:[%s687 + $0x20] sm:$0xff] %v696
                %v698 = vld [vmem:[%s686 + $0x28] sm:$0xff]
                %699 = vst [vmem:[%s687 + $0x28] sm:$0xff] %v698
                %v700 = vld [vmem:[%s686 + $0x30] sm:$0xff]
                %701 = vst [vmem:[%s687 + $0x30] sm:$0xff] %v700
                %v702 = vld [vmem:[%s686 + $0x38] sm:$0xff]
                %703 = vst [vmem:[%s687 + $0x38] sm:$0xff] %v702
                %s704 = sadd.s32 1, %s685
                %p705 = scmp.ge.s32.totalorder %s704, %s678
                %s706 = scalar_select %p705, 0, %s704
                %s707 = smul.u32 %s706, 64
                %s708 = smul.u32 %s706, 64
                %s709 = scalar_lea.vmem %s658, %s707 [#allocation4]
                %s710 = scalar_lea.vmem %s669, %s708
              $region57: #{tpu_custom_call.1} parent=51 // loop_footer
                %s682 = sadd.s32 %s680, 1
              $region58: #{tpu_custom_call.1} parent=51 // loop_footer_branch
                %679 = sbr.rel target = $region54
              $region59: #{tpu_custom_call.1} parent=51 // loop_exit
                _
              %s711 = sshrl.u32 %s665, 3
              %s712 = sand.u32 %s665, 7
              %s713 = smul.u32 %s711, 8
              %s714 = smul.u32 8, %s713
              %s715 = scalar_lea.vmem %s658, %s714 [#allocation4]
              %s716 = smul.u32 8, %s713
              %s717 = scalar_lea.vmem %s669, %s716
              // While loop
              $region60: #{tpu_custom_call.1} parent=51 // loop_pre_header
                _
              $region61: #{tpu_custom_call.1} parent=51 // loop_header
                %s719 = sphi 0, %s721
                %p720 = scmp.ge.s32.totalorder %s719, %s712
                %s724 = sphi 0, %s731
                %s725 = sphi %s715, %s734
                %s726 = sphi %s717, %s735
              $region62: #{tpu_custom_call.1} parent=51 // loop_header_branch
                %723 = sbr.rel (%p720) target = $region66
              $region63: #{tpu_custom_call.1} parent=51 // loop_body
                %v727 = vld [vmem:[%s725] sm:$0xff]
                %728 = vst [vmem:[%s726] sm:$0xff] %v727
                %s729 = sadd.s32 1, %s724
                %p730 = scmp.ge.s32.totalorder %s729, %s712
                %s731 = scalar_select %p730, 0, %s729
                %s732 = smul.u32 %s731, 8
                %s733 = smul.u32 %s731, 8
                %s734 = scalar_lea.vmem %s715, %s732 [#allocation4]
                %s735 = scalar_lea.vmem %s717, %s733
              $region64: #{tpu_custom_call.1} parent=51 // loop_footer
                %s721 = sadd.s32 %s719, 1
              $region65: #{tpu_custom_call.1} parent=51 // loop_footer_branch
                %718 = sbr.rel target = $region61
              $region66: #{tpu_custom_call.1} parent=51 // loop_exit
                _
            $region52: #{tpu_custom_call.1} parent=43 // pred_fallthru
              _
          $region44: #{tpu_custom_call.1} parent=39 // pred_fallthru
            _
          %798 = vnop
        $region40: #{tpu_custom_call.1} parent=31 // pred_fallthru
          _
      $region32: #{tpu_custom_call.1} parent=5 // pred_fallthru
        _
      %p799 = scmp.le.s32.totalorder 2, %s12
      // Predicated region
      $region89: #{tpu_custom_call.1} parent=5 // pred_check
        %p800 = pneg %p799
      $region90: #{tpu_custom_call.1} parent=5 // pred_check_branch
        %802 = sbr.rel (%p800) target = $region92
      $region91: #{tpu_custom_call.1} parent=5 // pred_region
        %s803 = ssub.s32 %s12, 2
        // Predicated region
        $region93: #{tpu_custom_call.1} parent=91 // pred_check
          %p804 = pneg %p109
        $region94: #{tpu_custom_call.1} parent=91 // pred_check_branch
          %806 = sbr.rel (%p804) target = $region96
        $region95: #{tpu_custom_call.1} parent=91 // pred_region
          %s807 = sand.u32 %s94, 1
          %s808 = sand.u32 %s94, 1
          %s809 = smul.addr %s808, 64
          %s810 = scalar_lea.vmem [#allocation4], %s809
        $region96: #{tpu_custom_call.1} parent=91 // pred_fallthru
          _
      $region92: #{tpu_custom_call.1} parent=5 // pred_fallthru
        _
    $region6: #{tpu_custom_call.1} parent=1 // loop_footer
      %s16 = sadd.s32 1, %s12
    $region7: #{tpu_custom_call.1} parent=1 // loop_footer_branch
      %11 = sbr.rel target = $region3
    $region8: #{tpu_custom_call.1} parent=1 // loop_exit
      _
    %811 = vsyncpa [#allocation3], 1
    %s812 = scalar_lea.sflag [#allocation3], 1
    %813 = vsyncpa %s812, 1

</llo_original>
